<compile_context>
chip_gen: v7x
topology: tpu7x:2x2x1
jax: 0.10.0
libtpu: 0.0.40
codegen_flags: <defaults>
</compile_context>

<pallas_src>
import functools
import math

import jax
import jax.numpy as jnp
from jax import lax
from jax.experimental import pallas as pl
from jax.experimental.pallas import tpu as pltpu

LANE = 128
SUBLANE = 8


def _round_up(n, m):
    return ((n + m - 1) // m) * m


def transformer_block_kernel(x_ref,
                             wqkv_ref, bqkv_ref,
                             wc_ref, bc_ref,
                             wo_ref, bo_ref,
                             out_ref,
                             *, approx_recip):
    Sp, Ep = x_ref.shape
    mxu_dtype = wqkv_ref.dtype

    x = x_ref[...]                                   # (Sp, Ep) f32
    x_m = x.astype(mxu_dtype)                        # single cast, reused

    # --- fused QKV projection (1/sqrt(E) already folded into the q columns) ---
    qkv = jnp.dot(x_m, wqkv_ref[...],
                  preferred_element_type=jnp.float32) + bqkv_ref[...]   # (Sp, 3Ep)
    q = qkv[:, :Ep]                                  # static, lane-aligned slices
    k = qkv[:, Ep:2 * Ep]
    v = qkv[:, 2 * Ep:]

    # scores[i, j] = q[i, :] . k[j, :]  (no explicit transpose)
    scores = lax.dot_general(
        q.astype(mxu_dtype), k.astype(mxu_dtype),
        dimension_numbers=(((1,), (1,)), ((), ())),
        preferred_element_type=jnp.float32)          # (Sp, Sp)

    # causal mask with a large finite negative (NaN-safe even for padded rows)
    rows = lax.broadcasted_iota(jnp.int32, (Sp, Sp), 0)
    cols = lax.broadcasted_iota(jnp.int32, (Sp, Sp), 1)
    scores = jnp.where(cols <= rows, scores, -1e30)

    # numerically-stable softmax in f32; divide on the EUP via pl.reciprocal
    m = jnp.max(scores, axis=-1, keepdims=True)
    e = jnp.exp(scores - m)
    p = e * pl.reciprocal(jnp.sum(e, axis=-1, keepdims=True), approx=approx_recip)

    attn = jnp.dot(p.astype(mxu_dtype), v.astype(mxu_dtype),
                   preferred_element_type=jnp.float32)                  # (Sp, Ep)

    h = x + attn                                     # residual 1 (f32)

    # --- MLP ---
    hid = jnp.maximum(
        jnp.dot(h.astype(mxu_dtype), wc_ref[...],
                preferred_element_type=jnp.float32) + bc_ref[...], 0.0)  # (Sp, Mp)
    mlp = jnp.dot(hid.astype(mxu_dtype), wo_ref[...],
                  preferred_element_type=jnp.float32) + bo_ref[...]      # (Sp, Ep)

    out_ref[...] = (h + mlp).astype(out_ref.dtype)   # residual 2, lane-dense store


def prepare_params(params, embed_dim, mlp_dim, *, mxu_dtype=jnp.bfloat16):
    """One-time transform: fold 1/sqrt(E) into q, fuse QKV, pad lane-dense,
    store weights in the MXU dtype (biases stay f32)."""
    Ep, Mp = _round_up(embed_dim, LANE), _round_up(mlp_dim, LANE)
    scale = 1.0 / math.sqrt(embed_dim)

    def pad2(a, r, c):
        return jnp.pad(a, ((0, r - a.shape[0]), (0, c - a.shape[1])))

    wqkv = jnp.concatenate(
        [pad2(params["wq"] * scale, Ep, Ep),
         pad2(params["wk"], Ep, Ep),
         pad2(params["wv"], Ep, Ep)], axis=1)                     # (Ep, 3Ep)
    bqkv = jnp.concatenate(
        [pad2(params["bq"] * scale, 1, Ep),
         pad2(params["bk"], 1, Ep),
         pad2(params["bv"], 1, Ep)], axis=1)                      # (1, 3Ep)

    return dict(
        wqkv=wqkv.astype(mxu_dtype), bqkv=bqkv.astype(jnp.float32),
        wc=pad2(params["wc"], Ep, Mp).astype(mxu_dtype),
        bc=pad2(params["bc"], 1, Mp).astype(jnp.float32),
        wo=pad2(params["wo"], Mp, Ep).astype(mxu_dtype),
        bo=pad2(params["bo"], 1, Ep).astype(jnp.float32),
    )


def _vmem_limit_bytes(Sp, Ep, Mp, mxu_bytes):
    """Derive the scoped VMEM limit from the actual working set."""
    weights = mxu_bytes * (Ep * 3 * Ep + Ep * Mp + Mp * Ep) + 4 * (3 * Ep + Mp + Ep)
    # per-step f32 activations: x, qkv, attn, h, hid, mlp, scores (+ exp temp)
    act_f32 = 4 * Sp * (Ep + 3 * Ep + 3 * Ep + Mp + Ep + 2 * Sp)
    # MXU-dtype copies of the matmul operands
    act_mxu = mxu_bytes * Sp * (Ep + 3 * Ep + Sp + Mp + Ep)
    # double-buffered x / out tiles streamed by the pipeline
    io = 2 * 2 * 4 * Sp * Ep
    est = weights + act_f32 + act_mxu + io
    try:
        cap = int(0.8 * pltpu.get_tpu_info().vmem_capacity_bytes)
    except Exception:
        cap = 100 * 1024 * 1024   # v5e/v6e-sized fallback
    return int(min(max(32 * 1024 * 1024, 1.5 * est), cap))


def transformer_block(x, prepared, *, approx_recip=True):
    """x: (B, S, E) f32.  prepared: output of prepare_params (fused/padded/bf16)."""
    B, S, E = x.shape
    Ep = prepared["wqkv"].shape[0]
    Mp = prepared["wc"].shape[1]
    Sp = _round_up(S, SUBLANE)

    x_pad = jnp.pad(x, ((0, 0), (0, Sp - S), (0, Ep - E))) \
        if (Sp != S or Ep != E) else x

    kernel = functools.partial(transformer_block_kernel, approx_recip=approx_recip)

    # activations stream per batch element; weights use a constant index_map so
    # they are loaded once and stay VMEM-resident across grid steps.
    def const2(i):
        return (0, 0)

    grid_spec = pltpu.PrefetchScalarGridSpec(
        num_scalar_prefetch=0,
        grid=(B,),
        in_specs=[
            pl.BlockSpec((None, Sp, Ep), lambda b: (b, 0, 0)),            # x
            pl.BlockSpec(prepared["wqkv"].shape, const2),                 # wqkv
            pl.BlockSpec(prepared["bqkv"].shape, const2),                 # bqkv
            pl.BlockSpec(prepared["wc"].shape, const2),                   # wc
            pl.BlockSpec(prepared["bc"].shape, const2),                   # bc
            pl.BlockSpec(prepared["wo"].shape, const2),                   # wo
            pl.BlockSpec(prepared["bo"].shape, const2),                   # bo
        ],
        out_specs=pl.BlockSpec((None, Sp, Ep), lambda b: (b, 0, 0)),
    )

    mxu_bytes = jnp.dtype(prepared["wqkv"].dtype).itemsize
    out_pad = pl.pallas_call(
        kernel,
        out_shape=jax.ShapeDtypeStruct((B, Sp, Ep), x.dtype),
        grid_spec=grid_spec,
        compiler_params=pltpu.CompilerParams(
            dimension_semantics=("parallel",),     # megacore on v7x
            vmem_limit_bytes=_vmem_limit_bytes(Sp, Ep, Mp, mxu_bytes)),
    )(x_pad,
      prepared["wqkv"], prepared["bqkv"],
      prepared["wc"], prepared["bc"],
      prepared["wo"], prepared["bo"])

    return out_pad[:, :S, :E]


def init_params(key, embed_dim, mlp_dim):
    """Deterministic synthetic init (PyTorch-Linear-like uniform ranges)."""
    ks = jax.random.split(key, 10)

    def lin(kw, kb, fan_in, fan_out):
        bound = 1.0 / math.sqrt(fan_in)
        w = jax.random.uniform(kw, (fan_in, fan_out), jnp.float32, -bound, bound)
        b = jax.random.uniform(kb, (1, fan_out), jnp.float32, -bound, bound)
        return w, b

    wq, bq = lin(ks[0], ks[1], embed_dim, embed_dim)
    wk, bk = lin(ks[2], ks[3], embed_dim, embed_dim)
    wv, bv = lin(ks[4], ks[5], embed_dim, embed_dim)
    wc, bc = lin(ks[6], ks[7], embed_dim, mlp_dim)
    wo, bo = lin(ks[8], ks[9], mlp_dim, embed_dim)
    return dict(wq=wq, bq=bq, wk=wk, bk=bk, wv=wv, bv=bv,
                wc=wc, bc=bc, wo=wo, bo=bo)


def reference_block(x, p):
    """Pure-JAX f32 reference matching the PyTorch forward."""
    q = x @ p["wq"] + p["bq"]
    k = x @ p["wk"] + p["bk"]
    v = x @ p["wv"] + p["bv"]
    S = x.shape[1]
    scores = q @ jnp.swapaxes(k, -1, -2) / math.sqrt(q.shape[-1])
    mask = jnp.triu(jnp.full((S, S), -jnp.inf), k=1)
    scores = jax.nn.softmax(scores + mask, axis=-1)
    h = x + scores @ v
    mlp = jnp.maximum(h @ p["wc"] + p["bc"], 0.0) @ p["wo"] + p["bo"]
    return h + mlp


if __name__ == "__main__":
    B, S, E, M = 2, 8, 32, 64
    key = jax.random.PRNGKey(0)
    kx, kp = jax.random.split(key)
    x = jax.random.normal(kx, (B, S, E), dtype=jnp.float32)
    params = init_params(kp, E, M)

    ref = reference_block(x, params)

    # exact-semantics check: f32 weights on the MXU, exact reciprocal
    prep_f32 = prepare_params(params, E, M, mxu_dtype=jnp.float32)
    out_f32 = jax.block_until_ready(
        transformer_block(x, prep_f32, approx_recip=False))
    assert out_f32.shape == (B, S, E)
    assert jnp.allclose(out_f32, ref, atol=1e-4, rtol=1e-4), "f32 kernel mismatch"

    # fast path: bf16 weights / MXU operands (v6e/v7x peak), f32 elementwise math
    prep_bf16 = prepare_params(params, E, M, mxu_dtype=jnp.bfloat16)
    out_bf16 = jax.block_until_ready(
        transformer_block(x, prep_bf16, approx_recip=True))
    assert out_bf16.shape == (B, S, E)
    assert jnp.allclose(out_bf16, ref, atol=1e-1, rtol=1e-1), "bf16 kernel mismatch"

    print("KERNEL_OK")
</pallas_src>

<mosaic_0001>
module attributes {stable_mosaic.version = 11 : i64} {
  func.func @transformer_block_kernel(%arg0: i32, %arg1: memref<1x8x128xf32, #tpu.memory_space<vmem>>, %arg2: memref<128x384xf32, #tpu.memory_space<vmem>>, %arg3: memref<1x384xf32, #tpu.memory_space<vmem>>, %arg4: memref<128x128xf32, #tpu.memory_space<vmem>>, %arg5: memref<1x128xf32, #tpu.memory_space<vmem>>, %arg6: memref<128x128xf32, #tpu.memory_space<vmem>>, %arg7: memref<1x128xf32, #tpu.memory_space<vmem>>, %arg8: memref<1x8x128xf32, #tpu.memory_space<vmem>>) attributes {dimension_semantics = [#tpu.dimension_semantics<parallel>], iteration_bounds = array<i64: 2>, scalar_prefetch = 0 : i64, scratch_operands = 0 : i64, tpu.core_type = #tpu.core_type<tc>, window_params = [{transform_indices = @transform_0, window_bounds = array<i64: 1, 8, 128>}, {pipeline_mode = #tpu.pipeline_mode<synchronous>, transform_indices = @transform_1, window_bounds = array<i64: 128, 384>}, {pipeline_mode = #tpu.pipeline_mode<synchronous>, transform_indices = @transform_2, window_bounds = array<i64: 1, 384>}, {pipeline_mode = #tpu.pipeline_mode<synchronous>, transform_indices = @transform_3, window_bounds = array<i64: 128, 128>}, {pipeline_mode = #tpu.pipeline_mode<synchronous>, transform_indices = @transform_4, window_bounds = array<i64: 1, 128>}, {pipeline_mode = #tpu.pipeline_mode<synchronous>, transform_indices = @transform_5, window_bounds = array<i64: 128, 128>}, {pipeline_mode = #tpu.pipeline_mode<synchronous>, transform_indices = @transform_6, window_bounds = array<i64: 1, 128>}, {transform_indices = @transform_7, window_bounds = array<i64: 1, 8, 128>}]} {
    %c0 = arith.constant 0 : index
    %c0_0 = arith.constant 0 : index
    %c0_1 = arith.constant 0 : index
    %0 = vector.load %arg1[%c0, %c0_0, %c0_1] : memref<1x8x128xf32, #tpu.memory_space<vmem>>, vector<1x8x128xf32>
    %1 = vector.shape_cast %0 : vector<1x8x128xf32> to vector<8x128xf32>
    %c0_2 = arith.constant 0 : index
    %c0_3 = arith.constant 0 : index
    %2 = vector.load %arg2[%c0_2, %c0_3] : memref<128x384xf32, #tpu.memory_space<vmem>>, vector<128x384xf32>
    %cst = arith.constant dense<0.000000e+00> : vector<8x384xf32>
    %3 = tpu.matmul %1, %2, %cst {dimension_numbers = #tpu.dot_dimension_numbers<[1], [0], [0], [1], [0, 0, 1, 1], [], []>} : vector<8x128xf32>, vector<128x384xf32>, vector<8x384xf32> -> vector<8x384xf32>
    %c0_4 = arith.constant 0 : index
    %c0_5 = arith.constant 0 : index
    %4 = vector.load %arg3[%c0_4, %c0_5] : memref<1x384xf32, #tpu.memory_space<vmem>>, vector<1x384xf32>
    %5 = vector.broadcast %4 : vector<1x384xf32> to vector<8x384xf32>
    %6 = arith.addf %3, %5 : vector<8x384xf32>
    %7 = vector.extract_strided_slice %6 {offsets = [0, 0], sizes = [8, 128], strides = [1, 1]} : vector<8x384xf32> to vector<8x128xf32>
    %8 = vector.extract_strided_slice %6 {offsets = [0, 128], sizes = [8, 128], strides = [1, 1]} : vector<8x384xf32> to vector<8x128xf32>
    %9 = vector.extract_strided_slice %6 {offsets = [0, 256], sizes = [8, 128], strides = [1, 1]} : vector<8x384xf32> to vector<8x128xf32>
    %cst_6 = arith.constant dense<0.000000e+00> : vector<8x8xf32>
    %10 = tpu.matmul %7, %8, %cst_6 {dimension_numbers = #tpu.dot_dimension_numbers<[1], [1], [0], [0], [0, 0, 1, 0], [], []>} : vector<8x128xf32>, vector<8x128xf32>, vector<8x8xf32> -> vector<8x8xf32>
    %11 = tpu.iota {dimensions = array<i32: 0>} : vector<8x8xi32>
    %12 = tpu.iota {dimensions = array<i32: 1>} : vector<8x8xi32>
    %13 = arith.cmpi sle, %12, %11 : vector<8x8xi32>
    %cst_7 = arith.constant -1.000000e+30 : f32
    %14 = vector.broadcast %cst_7 : f32 to vector<8x8xf32>
    %15 = arith.select %13, %10, %14 : vector<8x8xi1>, vector<8x8xf32>
    %cst_8 = arith.constant dense<0xFF800000> : vector<8xf32>
    %16 = vector.multi_reduction <maximumf>, %15, %cst_8 [1] : vector<8x8xf32> to vector<8xf32>
    %17 = vector.shape_cast %16 : vector<8xf32> to vector<8x1xf32>
    %18 = vector.broadcast %17 : vector<8x1xf32> to vector<8x8xf32>
    %19 = arith.subf %15, %18 : vector<8x8xf32>
    %20 = math.exp %19 : vector<8x8xf32>
    %cst_9 = arith.constant dense<0.000000e+00> : vector<8xf32>
    %21 = vector.multi_reduction <add>, %20, %cst_9 [1] : vector<8x8xf32> to vector<8xf32>
    %22 = vector.shape_cast %21 : vector<8xf32> to vector<8x1xf32>
    %23 = tpu.reciprocal %22 : vector<8x1xf32> -> vector<8x1xf32>
    %24 = vector.broadcast %23 : vector<8x1xf32> to vector<8x8xf32>
    %25 = arith.mulf %20, %24 : vector<8x8xf32>
    %cst_10 = arith.constant dense<0.000000e+00> : vector<8x128xf32>
    %26 = tpu.matmul %25, %9, %cst_10 {dimension_numbers = #tpu.dot_dimension_numbers<[1], [0], [0], [1], [0, 0, 1, 1], [], []>} : vector<8x8xf32>, vector<8x128xf32>, vector<8x128xf32> -> vector<8x128xf32>
    %27 = arith.addf %1, %26 : vector<8x128xf32>
    %c0_11 = arith.constant 0 : index
    %c0_12 = arith.constant 0 : index
    %28 = vector.load %arg4[%c0_11, %c0_12] : memref<128x128xf32, #tpu.memory_space<vmem>>, vector<128x128xf32>
    %cst_13 = arith.constant dense<0.000000e+00> : vector<8x128xf32>
    %29 = tpu.matmul %27, %28, %cst_13 {dimension_numbers = #tpu.dot_dimension_numbers<[1], [0], [0], [1], [0, 0, 1, 1], [], []>} : vector<8x128xf32>, vector<128x128xf32>, vector<8x128xf32> -> vector<8x128xf32>
    %c0_14 = arith.constant 0 : index
    %c0_15 = arith.constant 0 : index
    %30 = vector.load %arg5[%c0_14, %c0_15] : memref<1x128xf32, #tpu.memory_space<vmem>>, vector<1x128xf32>
    %31 = vector.broadcast %30 : vector<1x128xf32> to vector<8x128xf32>
    %32 = arith.addf %29, %31 : vector<8x128xf32>
    %cst_16 = arith.constant 0.000000e+00 : f32
    %33 = vector.broadcast %cst_16 : f32 to vector<8x128xf32>
    %34 = arith.maximumf %32, %33 : vector<8x128xf32>
    %c0_17 = arith.constant 0 : index
    %c0_18 = arith.constant 0 : index
    %35 = vector.load %arg6[%c0_17, %c0_18] : memref<128x128xf32, #tpu.memory_space<vmem>>, vector<128x128xf32>
    %cst_19 = arith.constant dense<0.000000e+00> : vector<8x128xf32>
    %36 = tpu.matmul %34, %35, %cst_19 {dimension_numbers = #tpu.dot_dimension_numbers<[1], [0], [0], [1], [0, 0, 1, 1], [], []>} : vector<8x128xf32>, vector<128x128xf32>, vector<8x128xf32> -> vector<8x128xf32>
    %c0_20 = arith.constant 0 : index
    %c0_21 = arith.constant 0 : index
    %37 = vector.load %arg7[%c0_20, %c0_21] : memref<1x128xf32, #tpu.memory_space<vmem>>, vector<1x128xf32>
    %38 = vector.broadcast %37 : vector<1x128xf32> to vector<8x128xf32>
    %39 = arith.addf %36, %38 : vector<8x128xf32>
    %40 = arith.addf %27, %39 : vector<8x128xf32>
    %c0_22 = arith.constant 0 : index
    %c0_23 = arith.constant 0 : index
    %c0_24 = arith.constant 0 : index
    %41 = vector.load %arg8[%c0_22, %c0_23, %c0_24] : memref<1x8x128xf32, #tpu.memory_space<vmem>>, vector<1x8x128xf32>
    %42 = vector.shape_cast %41 : vector<1x8x128xf32> to vector<8x128xf32>
    %43 = vector.shape_cast %40 : vector<8x128xf32> to vector<1x8x128xf32>
    tpu.vector_store %arg8[%c0_22, %c0_23, %c0_24], %43 {strides = array<i32>} : memref<1x8x128xf32, #tpu.memory_space<vmem>>, vector<1x8x128xf32>,
    return
  }
  func.func @transform_0(%arg0: i32) -> (i32, i32, i32) {
    %c0_i32 = arith.constant 0 : i32
    %c0_i32_0 = arith.constant 0 : i32
    %c0_i32_1 = arith.constant 0 : i32
    return %arg0, %c0_i32, %c0_i32_0 : i32, i32, i32
  }
  func.func @transform_1(%arg0: i32) -> (i32, i32) {
    %c0_i32 = arith.constant 0 : i32
    %c0_i32_0 = arith.constant 0 : i32
    %c0_i32_1 = arith.constant 0 : i32
    return %c0_i32, %c0_i32_0 : i32, i32
  }
  func.func @transform_2(%arg0: i32) -> (i32, i32) {
    %c0_i32 = arith.constant 0 : i32
    %c0_i32_0 = arith.constant 0 : i32
    %c0_i32_1 = arith.constant 0 : i32
    return %c0_i32, %c0_i32_0 : i32, i32
  }
  func.func @transform_3(%arg0: i32) -> (i32, i32) {
    %c0_i32 = arith.constant 0 : i32
    %c0_i32_0 = arith.constant 0 : i32
    %c0_i32_1 = arith.constant 0 : i32
    return %c0_i32, %c0_i32_0 : i32, i32
  }
  func.func @transform_4(%arg0: i32) -> (i32, i32) {
    %c0_i32 = arith.constant 0 : i32
    %c0_i32_0 = arith.constant 0 : i32
    %c0_i32_1 = arith.constant 0 : i32
    return %c0_i32, %c0_i32_0 : i32, i32
  }
  func.func @transform_5(%arg0: i32) -> (i32, i32) {
    %c0_i32 = arith.constant 0 : i32
    %c0_i32_0 = arith.constant 0 : i32
    %c0_i32_1 = arith.constant 0 : i32
    return %c0_i32, %c0_i32_0 : i32, i32
  }
  func.func @transform_6(%arg0: i32) -> (i32, i32) {
    %c0_i32 = arith.constant 0 : i32
    %c0_i32_0 = arith.constant 0 : i32
    %c0_i32_1 = arith.constant 0 : i32
    return %c0_i32, %c0_i32_0 : i32, i32
  }
  func.func @transform_7(%arg0: i32) -> (i32, i32, i32) {
    %c0_i32 = arith.constant 0 : i32
    %c0_i32_0 = arith.constant 0 : i32
    %c0_i32_1 = arith.constant 0 : i32
    return %arg0, %c0_i32, %c0_i32_0 : i32, i32, i32
  }
}

</mosaic_0001>

<llo_original>
// kernel: tpu_custom_call.1
$region0: #{tpu_custom_call.1}
  #allocation0 [shape = 'u32[]', space=smem, size = 0x4, offset = 0x4, fixed_abs, tag = 'smem constant byte address 0x4 - core index']
  #allocation1 [shape = 'u32[144,128]{1,0:T(1,128)}', space=vmem, size = 0x12000, scoped, tag = 'internal scratch']
  %s0 = inlined_call_operand.hbm [shape: f32[2,8,128], index: 0, kind: input, shape index: {}]
  %s1 = inlined_call_operand.hbm [shape: f32[128,384], index: 1, kind: input, shape index: {}]
  %s2 = inlined_call_operand.vmem [shape: f32[1,384], index: 2, kind: input, shape index: {}]
  %s3 = inlined_call_operand.hbm [shape: f32[128,128], index: 3, kind: input, shape index: {}]
  %s4 = inlined_call_operand.vmem [shape: f32[1,128], index: 4, kind: input, shape index: {}]
  %s5 = inlined_call_operand.hbm [shape: f32[128,128], index: 5, kind: input, shape index: {}]
  %s6 = inlined_call_operand.vmem [shape: f32[1,128], index: 6, kind: input, shape index: {}]
  %s7 = inlined_call_operand.hbm [shape: f32[2,8,128], index: 7, kind: output, shape index: {}]
  %s8 = sld [smem:[#allocation0]]
  $region77: #{tpu_custom_call.1} parent=0
    _
  %s10 = ssub.s32 1, %s8
  %s11 = scalar_select 0, %s10, %s8
  $region1: #{tpu_custom_call.1} parent=0
    #allocation2 [shape = 'u8[8192]{0}', space=vmem, size = 0x2000, scoped, tag = 'input window, operand 0']
    #allocation3 [shape = 's32[2]{0}', space=sflag, size = 0x8, scoped, tag = 'scoped memory for tpu_custom_call.1']
    #allocation4 [shape = 's32[2]{0}', space=sflag, size = 0x8, scoped, tag = 'scoped memory for tpu_custom_call.1']
    #allocation5 [shape = 'u8[196608]{0}', space=vmem, size = 0x30000, scoped, tag = 'input window, operand 1, single buffered']
    #allocation6 [shape = 's32[1]{0}', space=sflag, size = 0x4, scoped, tag = 'scoped memory for tpu_custom_call.1']
    #allocation7 [shape = 'u8[65536]{0}', space=vmem, size = 0x10000, scoped, tag = 'input window, operand 3, single buffered']
    #allocation8 [shape = 'u8[65536]{0}', space=vmem, size = 0x10000, scoped, tag = 'input window, operand 5, single buffered']
    #allocation9 [shape = 's32[1]{0}', space=sflag, size = 0x4, scoped, tag = 'scoped memory for tpu_custom_call.1']
    #allocation10 [shape = 'u8[8192]{0}', space=vmem, size = 0x2000, scoped, tag = 'output window, operand 0']
    %12 = vsyncpa [#allocation3], 0
    %s13 = scalar_lea.sflag [#allocation3], 1
    %14 = vsyncpa %s13, 0
    %15 = vsyncpa [#allocation6], 0
    %16 = vsyncpa [#allocation9], 0
    %17 = vsyncpa [#allocation4], 0
    %s18 = scalar_lea.sflag [#allocation4], 1
    %19 = vsyncpa %s18, 0
    loop: start=0, step=1, limit=4
    $region2: #{tpu_custom_call.1} parent=1 // loop_pre_header
      _
    $region3: #{tpu_custom_call.1} parent=1 // loop_header
      %s21 = sphi 0, %s25
      %p22 = scmp.ge.s32.totalorder %s21, 4
      %s31 = sphi 0, %s33
      %s34 = sphi 0, %s31
      %s35 = sphi 0, %s34
      %s51 = sphi 0, %s35
      %s55 = sphi 0, %s55
      %s57 = sphi 0, %s55
      %s58 = sphi 0, %s57
      %s72 = sphi 0, %s58
      %s76 = sphi 0, %s76
      %s78 = sphi 0, %s76
      %s79 = sphi 0, %s78
      %s93 = sphi 0, %s79
      %s97 = sphi 0, %s97
      %s99 = sphi 0, %s97
      %s100 = sphi 0, %s99
      %s114 = sphi 0, %s100
      %s118 = sphi 0, %s118
      %s120 = sphi 0, %s118
      %s121 = sphi 0, %s120
      %s135 = sphi 0, %s121
      %s139 = sphi 0, %s139
      %s141 = sphi 0, %s139
      %s142 = sphi 0, %s141
      %s156 = sphi 0, %s142
      %s160 = sphi 0, %s160
      %s162 = sphi 0, %s160
      %s163 = sphi 0, %s162
      %s177 = sphi 0, %s163
      %s183 = sphi 0, %s185
      %s186 = sphi 0, %s183
      %s187 = sphi 0, %s186
      %s203 = sphi 0, %s187
    $region4: #{tpu_custom_call.1} parent=1 // loop_header_branch
      %24 = sbr.rel (%p22) target = $region8
    $region5: #{tpu_custom_call.1} parent=1 // loop_body
      %s26 = ssub.s32 %s21, 1
      %s27 = ssub.s32 %s21, 2
      %s28 = sadd.s32 %s21, 1
      %s29 = ssub.s32 %s21, %s28
      %p30 = scmp.eq.s32.totalorder %s29, 0
      %s32 = sadd.s32 %s31, 1
      %s33 = scalar_select %p30, %s31, %s32
      %p36 = pneg %p30
      %p37 = scmp.eq.s32.totalorder %s21, 1
      %p38 = por %p36, %p37
      %p39 = scmp.ne.s32.totalorder %s31, %s34
      %p40 = scmp.eq.s32.totalorder %s21, 0
      %p41 = por %p39, %p40
      %p42 = scmp.ne.s32.totalorder %s31, %s34
      %p43 = scmp.eq.s32.totalorder %s26, 1
      %p44 = por %p42, %p43
      %p45 = scmp.ne.s32.totalorder %s34, %s35
      %p46 = scmp.eq.s32.totalorder %s26, 0
      %p47 = por %p45, %p46
      %p48 = scmp.ne.s32.totalorder %s34, %s35
      %p49 = scmp.eq.s32.totalorder %s27, 1
      %p50 = por %p48, %p49
      %p52 = scmp.ne.s32.totalorder %s35, %s51
      %p53 = scmp.eq.s32.totalorder %s27, 0
      %p54 = por %p52, %p53
      %s56 = sadd.s32 %s55, 1
      %p59 = scmp.eq.s32.totalorder %s21, 1
      %p60 = scmp.ne.s32.totalorder %s55, %s57
      %p61 = scmp.eq.s32.totalorder %s21, 0
      %p62 = por %p60, %p61
      %p63 = scmp.ne.s32.totalorder %s55, %s57
      %p64 = scmp.eq.s32.totalorder %s26, 1
      %p65 = por %p63, %p64
      %p66 = scmp.ne.s32.totalorder %s57, %s58
      %p67 = scmp.eq.s32.totalorder %s26, 0
      %p68 = por %p66, %p67
      %p69 = scmp.ne.s32.totalorder %s57, %s58
      %p70 = scmp.eq.s32.totalorder %s27, 1
      %p71 = por %p69, %p70
      %p73 = scmp.ne.s32.totalorder %s58, %s72
      %p74 = scmp.eq.s32.totalorder %s27, 0
      %p75 = por %p73, %p74
      %s77 = sadd.s32 %s76, 1
      %p80 = scmp.eq.s32.totalorder %s21, 1
      %p81 = scmp.ne.s32.totalorder %s76, %s78
      %p82 = scmp.eq.s32.totalorder %s21, 0
      %p83 = por %p81, %p82
      %p84 = scmp.ne.s32.totalorder %s76, %s78
      %p85 = scmp.eq.s32.totalorder %s26, 1
      %p86 = por %p84, %p85
      %p87 = scmp.ne.s32.totalorder %s78, %s79
      %p88 = scmp.eq.s32.totalorder %s26, 0
      %p89 = por %p87, %p88
      %p90 = scmp.ne.s32.totalorder %s78, %s79
      %p91 = scmp.eq.s32.totalorder %s27, 1
      %p92 = por %p90, %p91
      %p94 = scmp.ne.s32.totalorder %s79, %s93
      %p95 = scmp.eq.s32.totalorder %s27, 0
      %p96 = por %p94, %p95
      %s98 = sadd.s32 %s97, 1
      %p101 = scmp.eq.s32.totalorder %s21, 1
      %p102 = scmp.ne.s32.totalorder %s97, %s99
      %p103 = scmp.eq.s32.totalorder %s21, 0
      %p104 = por %p102, %p103
      %p105 = scmp.ne.s32.totalorder %s97, %s99
      %p106 = scmp.eq.s32.totalorder %s26, 1
      %p107 = por %p105, %p106
      %p108 = scmp.ne.s32.totalorder %s99, %s100
      %p109 = scmp.eq.s32.totalorder %s26, 0
      %p110 = por %p108, %p109
      %p111 = scmp.ne.s32.totalorder %s99, %s100
      %p112 = scmp.eq.s32.totalorder %s27, 1
      %p113 = por %p111, %p112
      %p115 = scmp.ne.s32.totalorder %s100, %s114
      %p116 = scmp.eq.s32.totalorder %s27, 0
      %p117 = por %p115, %p116
      %s119 = sadd.s32 %s118, 1
      %p122 = scmp.eq.s32.totalorder %s21, 1
      %p123 = scmp.ne.s32.totalorder %s118, %s120
      %p124 = scmp.eq.s32.totalorder %s21, 0
      %p125 = por %p123, %p124
      %p126 = scmp.ne.s32.totalorder %s118, %s120
      %p127 = scmp.eq.s32.totalorder %s26, 1
      %p128 = por %p126, %p127
      %p129 = scmp.ne.s32.totalorder %s120, %s121
      %p130 = scmp.eq.s32.totalorder %s26, 0
      %p131 = por %p129, %p130
      %p132 = scmp.ne.s32.totalorder %s120, %s121
      %p133 = scmp.eq.s32.totalorder %s27, 1
      %p134 = por %p132, %p133
      %p136 = scmp.ne.s32.totalorder %s121, %s135
      %p137 = scmp.eq.s32.totalorder %s27, 0
      %p138 = por %p136, %p137
      %s140 = sadd.s32 %s139, 1
      %p143 = scmp.eq.s32.totalorder %s21, 1
      %p144 = scmp.ne.s32.totalorder %s139, %s141
      %p145 = scmp.eq.s32.totalorder %s21, 0
      %p146 = por %p144, %p145
      %p147 = scmp.ne.s32.totalorder %s139, %s141
      %p148 = scmp.eq.s32.totalorder %s26, 1
      %p149 = por %p147, %p148
      %p150 = scmp.ne.s32.totalorder %s141, %s142
      %p151 = scmp.eq.s32.totalorder %s26, 0
      %p152 = por %p150, %p151
      %p153 = scmp.ne.s32.totalorder %s141, %s142
      %p154 = scmp.eq.s32.totalorder %s27, 1
      %p155 = por %p153, %p154
      %p157 = scmp.ne.s32.totalorder %s142, %s156
      %p158 = scmp.eq.s32.totalorder %s27, 0
      %p159 = por %p157, %p158
      %s161 = sadd.s32 %s160, 1
      %p164 = scmp.eq.s32.totalorder %s21, 1
      %p165 = scmp.ne.s32.totalorder %s160, %s162
      %p166 = scmp.eq.s32.totalorder %s21, 0
      %p167 = por %p165, %p166
      %p168 = scmp.ne.s32.totalorder %s160, %s162
      %p169 = scmp.eq.s32.totalorder %s26, 1
      %p170 = por %p168, %p169
      %p171 = scmp.ne.s32.totalorder %s162, %s163
      %p172 = scmp.eq.s32.totalorder %s26, 0
      %p173 = por %p171, %p172
      %p174 = scmp.ne.s32.totalorder %s162, %s163
      %p175 = scmp.eq.s32.totalorder %s27, 1
      %p176 = por %p174, %p175
      %p178 = scmp.ne.s32.totalorder %s163, %s177
      %p179 = scmp.eq.s32.totalorder %s27, 0
      %p180 = por %p178, %p179
      %s181 = ssub.s32 %s21, %s28
      %p182 = scmp.eq.s32.totalorder %s181, 0
      %s184 = sadd.s32 %s183, 1
      %s185 = scalar_select %p182, %s183, %s184
      %p188 = pneg %p182
      %p189 = scmp.eq.s32.totalorder %s21, 1
      %p190 = por %p188, %p189
      %p191 = scmp.ne.s32.totalorder %s183, %s186
      %p192 = scmp.eq.s32.totalorder %s21, 0
      %p193 = por %p191, %p192
      %p194 = scmp.ne.s32.totalorder %s183, %s186
      %p195 = scmp.eq.s32.totalorder %s26, 1
      %p196 = por %p194, %p195
      %p197 = scmp.ne.s32.totalorder %s186, %s187
      %p198 = scmp.eq.s32.totalorder %s26, 0
      %p199 = por %p197, %p198
      %p200 = scmp.ne.s32.totalorder %s186, %s187
      %p201 = scmp.eq.s32.totalorder %s27, 1
      %p202 = por %p200, %p201
      %p204 = scmp.ne.s32.totalorder %s187, %s203
      %p205 = scmp.eq.s32.totalorder %s27, 0
      %p206 = por %p204, %p205
      %p207 = scmp.le.s32.totalorder 1, %s21
      %p208 = scmp.lt.s32.totalorder %s21, 3
      %p209 = pnand %p207, %p208
      %p210 = pneg %p209
      // Predicated region
      $region9: #{tpu_custom_call.1} parent=5 // pred_check
        _
      $region10: #{tpu_custom_call.1} parent=5 // pred_check_branch
        %212 = sbr.rel (%p209) target = $region12
      $region11: #{tpu_custom_call.1} parent=5 // pred_region
        %s213 = ssub.s32 %s21, 1
        // Predicated region
        $region13: #{tpu_custom_call.1} parent=11 // pred_check
          %p214 = pneg %p68
        $region14: #{tpu_custom_call.1} parent=11 // pred_check_branch
          %216 = sbr.rel (%p214) target = $region16
        $region15: #{tpu_custom_call.1} parent=11 // pred_region
          %s218 = ssub.s32 6144, 6144
          %219 = vsyncadd [#allocation6], %s218
          %s220 = sshll.u32 [#allocation5], 4
          %s221 = int_to_ptr.vmem [resolvable:$true] %s220
          %226 = dma.hbm_to_vmem [thread:$0]  %s1, 6144, %s221, [#allocation6], 384, 384, 24
        $region16: #{tpu_custom_call.1} parent=11 // pred_fallthru
          _
        // Predicated region
        $region17: #{tpu_custom_call.1} parent=11 // pred_check
          %p227 = pneg %p89
        $region18: #{tpu_custom_call.1} parent=11 // pred_check_branch
          %229 = sbr.rel (%p227) target = $region20
        $region19: #{tpu_custom_call.1} parent=11 // pred_region
          _
        $region20: #{tpu_custom_call.1} parent=11 // pred_fallthru
          _
        // Predicated region
        $region21: #{tpu_custom_call.1} parent=11 // pred_check
          %p230 = pneg %p110
        $region22: #{tpu_custom_call.1} parent=11 // pred_check_branch
          %232 = sbr.rel (%p230) target = $region24
        $region23: #{tpu_custom_call.1} parent=11 // pred_region
          %s234 = ssub.s32 2048, 2048
          %235 = vsyncadd [#allocation6], %s234
          %s236 = sshll.u32 [#allocation7], 4
          %s237 = int_to_ptr.vmem [resolvable:$true] %s236
          %242 = dma.hbm_to_vmem [thread:$0]  %s3, 2048, %s237, [#allocation6], 128, 128, 8
        $region24: #{tpu_custom_call.1} parent=11 // pred_fallthru
          _
        // Predicated region
        $region25: #{tpu_custom_call.1} parent=11 // pred_check
          %p243 = pneg %p131
        $region26: #{tpu_custom_call.1} parent=11 // pred_check_branch
          %245 = sbr.rel (%p243) target = $region28
        $region27: #{tpu_custom_call.1} parent=11 // pred_region
          _
        $region28: #{tpu_custom_call.1} parent=11 // pred_fallthru
          _
        // Predicated region
        $region29: #{tpu_custom_call.1} parent=11 // pred_check
          %p246 = pneg %p152
        $region30: #{tpu_custom_call.1} parent=11 // pred_check_branch
          %248 = sbr.rel (%p246) target = $region32
        $region31: #{tpu_custom_call.1} parent=11 // pred_region
          %s250 = ssub.s32 2048, 2048
          %251 = vsyncadd [#allocation9], %s250
          %s252 = sshll.u32 [#allocation8], 4
          %s253 = int_to_ptr.vmem [resolvable:$true] %s252
          %258 = dma.hbm_to_vmem [thread:$0]  %s5, 2048, %s253, [#allocation9], 128, 128, 8
        $region32: #{tpu_custom_call.1} parent=11 // pred_fallthru
          _
        // Predicated region
        $region33: #{tpu_custom_call.1} parent=11 // pred_check
          %p259 = pneg %p173
        $region34: #{tpu_custom_call.1} parent=11 // pred_check_branch
          %261 = sbr.rel (%p259) target = $region36
        $region35: #{tpu_custom_call.1} parent=11 // pred_region
          _
        $region36: #{tpu_custom_call.1} parent=11 // pred_fallthru
          _
      $region12: #{tpu_custom_call.1} parent=5 // pred_fallthru
        _
      %p262 = scmp.lt.s32.totalorder %s21, 2
      // Predicated region
      $region37: #{tpu_custom_call.1} parent=5 // pred_check
        %p263 = pneg %p262
      $region38: #{tpu_custom_call.1} parent=5 // pred_check_branch
        %265 = sbr.rel (%p263) target = $region40
      $region39: #{tpu_custom_call.1} parent=5 // pred_region
        // Predicated region
        $region41: #{tpu_custom_call.1} parent=39 // pred_check
          %p266 = pneg %p41
        $region42: #{tpu_custom_call.1} parent=39 // pred_check_branch
          %268 = sbr.rel (%p266) target = $region44
        $region43: #{tpu_custom_call.1} parent=39 // pred_region
          %s269 = sand.u32 %s31, 1
          %s270 = scalar_lea.sflag [#allocation3], %s269
          %s271 = sand.u32 %s31, 1
          %s272 = smul.addr %s271, 8
          %s273 = scalar_lea.vmem [#allocation2], %s272
          %s275 = ssub.s32 128, 128
          %276 = vsyncadd %s270, %s275
          %s277 = smul.addr %s21, 128
          %s278 = scalar_lea.hbm %s0, %s277
          %s280 = sshll.u32 %s273, 4
          %s281 = int_to_ptr.vmem [resolvable:$true] %s280
          %283 = dma.hbm_to_vmem [thread:$0]  %s278, 128, %s281, %s270
        $region44: #{tpu_custom_call.1} parent=39 // pred_fallthru
          _
      $region40: #{tpu_custom_call.1} parent=5 // pred_fallthru
        _
      %p284 = scmp.le.s32.totalorder 1, %s21
      %p285 = scmp.lt.s32.totalorder %s21, 3
      %p286 = pnand %p284, %p285
      %p287 = pneg %p286
      // Predicated region
      $region45: #{tpu_custom_call.1} parent=5 // pred_check
        _
      $region46: #{tpu_custom_call.1} parent=5 // pred_check_branch
        %289 = sbr.rel (%p286) target = $region48
      $region47: #{tpu_custom_call.1} parent=5 // pred_region
        %s290 = ssub.s32 %s21, 1
        %s291 = sand.u32 %s34, 1
        %s292 = scalar_lea.sflag [#allocation3], %s291
        %s293 = sand.u32 %s34, 1
        %s294 = smul.addr %s293, 8
        %s295 = scalar_lea.vmem [#allocation2], %s294
        // Predicated region
        $region49: #{tpu_custom_call.1} parent=47 // pred_check
          %p296 = pneg %p47
        $region50: #{tpu_custom_call.1} parent=47 // pred_check_branch
          %298 = sbr.rel (%p296) target = $region52
        $region51: #{tpu_custom_call.1} parent=47 // pred_region
          %299 = dma.done %s292, 128
        $region52: #{tpu_custom_call.1} parent=47 // pred_fallthru
          _
        // Predicated region
        $region53: #{tpu_custom_call.1} parent=47 // pred_check
          %p300 = pneg %p68
        $region54: #{tpu_custom_call.1} parent=47 // pred_check_branch
          %302 = sbr.rel (%p300) target = $region56
        $region55: #{tpu_custom_call.1} parent=47 // pred_region
          %303 = dma.done [#allocation6], 6144
        $region56: #{tpu_custom_call.1} parent=47 // pred_fallthru
          _
        // Predicated region
        $region57: #{tpu_custom_call.1} parent=47 // pred_check
          %p304 = pneg %p110
        $region58: #{tpu_custom_call.1} parent=47 // pred_check_branch
          %306 = sbr.rel (%p304) target = $region60
        $region59: #{tpu_custom_call.1} parent=47 // pred_region
          %307 = dma.done [#allocation6], 2048
        $region60: #{tpu_custom_call.1} parent=47 // pred_fallthru
          _
        // Predicated region
        $region61: #{tpu_custom_call.1} parent=47 // pred_check
          %p308 = pneg %p152
        $region62: #{tpu_custom_call.1} parent=47 // pred_check_branch
          %310 = sbr.rel (%p308) target = $region64
        $region63: #{tpu_custom_call.1} parent=47 // pred_region
          %311 = dma.done [#allocation9], 2048
        $region64: #{tpu_custom_call.1} parent=47 // pred_fallthru
          _
        %s312 = sand.u32 %s34, 1
        %s313 = scalar_lea.sflag [#allocation3], %s312
        %s314 = sand.u32 %s34, 1
        %s315 = smul.addr %s314, 8
        %s316 = scalar_lea.vmem [#allocation2], %s315
        %p317 = pneg %p47
        %p318 = pneg %p44
        %p319 = pneg %p68
        %p320 = pneg %p65
        %p321 = pneg %p89
        %p322 = pneg %p86
        %p323 = pneg %p110
        %p324 = pneg %p107
        %p325 = pneg %p131
        %p326 = pneg %p128
        %p327 = pneg %p152
        %p328 = pneg %p149
        %p329 = pneg %p173
        %p330 = pneg %p170
        %p331 = pneg %p199
        %p332 = pneg %p196
        %s333 = sand.u32 %s186, 1
        %s334 = scalar_lea.sflag [#allocation4], %s333
        %s335 = sand.u32 %s186, 1
        %s336 = smul.addr %s335, 8
        %s337 = scalar_lea.vmem [#allocation10], %s336
        %v338 = vld [vmem:[%s295] sm:$0xff]
        %v339 = vld [vmem:[#allocation5] sm:$0xff]
        %v340 = vld [vmem:[#allocation5 + $0x8] sm:$0xff]
        %v341 = vld [vmem:[#allocation5 + $0x10] sm:$0xff]
        %v342 = vld [vmem:[#allocation5 + $0x18] sm:$0xff]
        %v343 = vld [vmem:[#allocation5 + $0x20] sm:$0xff]
        %v344 = vld [vmem:[#allocation5 + $0x28] sm:$0xff]
        %v345 = vld [vmem:[#allocation5 + $0x30] sm:$0xff]
        %v346 = vld [vmem:[#allocation5 + $0x38] sm:$0xff]
        %v347 = vld [vmem:[#allocation5 + $0x40] sm:$0xff]
        %v348 = vld [vmem:[#allocation5 + $0x48] sm:$0xff]
        %v349 = vld [vmem:[#allocation5 + $0x50] sm:$0xff]
        %v350 = vld [vmem:[#allocation5 + $0x58] sm:$0xff]
        %v351 = vld [vmem:[#allocation5 + $0x60] sm:$0xff]
        %v352 = vld [vmem:[#allocation5 + $0x68] sm:$0xff]
        %v353 = vld [vmem:[#allocation5 + $0x70] sm:$0xff]
        %v354 = vld [vmem:[#allocation5 + $0x78] sm:$0xff]
        %v355 = vld [vmem:[#allocation5 + $0x80] sm:$0xff]
        %v356 = vld [vmem:[#allocation5 + $0x88] sm:$0xff]
        %v357 = vld [vmem:[#allocation5 + $0x90] sm:$0xff]
        %v358 = vld [vmem:[#allocation5 + $0x98] sm:$0xff]
        %v359 = vld [vmem:[#allocation5 + $0xa0] sm:$0xff]
        %v360 = vld [vmem:[#allocation5 + $0xa8] sm:$0xff]
        %v361 = vld [vmem:[#allocation5 + $0xb0] sm:$0xff]
        %v362 = vld [vmem:[#allocation5 + $0xb8] sm:$0xff]
        %v363 = vld [vmem:[#allocation5 + $0xc0] sm:$0xff]
        %v364 = vld [vmem:[#allocation5 + $0xc8] sm:$0xff]
        %v365 = vld [vmem:[#allocation5 + $0xd0] sm:$0xff]
        %v366 = vld [vmem:[#allocation5 + $0xd8] sm:$0xff]
        %v367 = vld [vmem:[#allocation5 + $0xe0] sm:$0xff]
        %v368 = vld [vmem:[#allocation5 + $0xe8] sm:$0xff]
        %v369 = vld [vmem:[#allocation5 + $0xf0] sm:$0xff]
        %v370 = vld [vmem:[#allocation5 + $0xf8] sm:$0xff]
        %v371 = vld [vmem:[#allocation5 + $0x100] sm:$0xff]
        %v372 = vld [vmem:[#allocation5 + $0x108] sm:$0xff]
        %v373 = vld [vmem:[#allocation5 + $0x110] sm:$0xff]
        %v374 = vld [vmem:[#allocation5 + $0x118] sm:$0xff]
        %v375 = vld [vmem:[#allocation5 + $0x120] sm:$0xff]
        %v376 = vld [vmem:[#allocation5 + $0x128] sm:$0xff]
        %v377 = vld [vmem:[#allocation5 + $0x130] sm:$0xff]
        %v378 = vld [vmem:[#allocation5 + $0x138] sm:$0xff]
        %v379 = vld [vmem:[#allocation5 + $0x140] sm:$0xff]
        %v380 = vld [vmem:[#allocation5 + $0x148] sm:$0xff]
        %v381 = vld [vmem:[#allocation5 + $0x150] sm:$0xff]
        %v382 = vld [vmem:[#allocation5 + $0x158] sm:$0xff]
        %v383 = vld [vmem:[#allocation5 + $0x160] sm:$0xff]
        %v384 = vld [vmem:[#allocation5 + $0x168] sm:$0xff]
        %v385 = vld [vmem:[#allocation5 + $0x170] sm:$0xff]
        %v386 = vld [vmem:[#allocation5 + $0x178] sm:$0xff]
        %v387 = vld [vmem:[%s2] sm:$0x7]
        %v389 = vlaneseq
        %v390 = vshrl.u32 %v389, 7
        %v391 = vsub.s32 0, %v390
        %v392 = vrot.slane %v387, %v391
        %v393 = vlaneseq
        %v394 = vshrl.u32 %v393, 7
        %v395 = vsub.s32 1, %v394
        %v396 = vrot.slane %v387, %v395
        %v397 = vlaneseq
        %v398 = vshrl.u32 %v397, 7
        %v399 = vsub.s32 2, %v398
        %v400 = vrot.slane %v387, %v399
        %404 = vmatprep.subr.mxu0 %v340
        %405 = vmatpush1.msra.mxu0 %v339
        %406 = vmatprep.subr.mxu0 %v343
        %407 = vmatpush1.msra.mxu0 %v342
        %408 = vmatprep.subr.mxu0 %v346
        %409 = vmatpush1.msra.mxu0 %v345
        %410 = vmatprep.subr.mxu0 %v349
        %411 = vmatpush1.msra.mxu0 %v348
        %412 = vmatprep.subr.mxu0 %v352
        %413 = vmatpush1.msra.mxu0 %v351
        %414 = vmatprep.subr.mxu0 %v355
        %415 = vmatpush1.msra.mxu0 %v354
        %416 = vmatprep.subr.mxu0 %v358
        %417 = vmatpush1.msra.mxu0 %v357
        %418 = vmatprep.subr.mxu0 %v361
        %419 = vmatpush1.msra.mxu0 %v360
        %420 = vmatprep.subr.mxu0 %v364
        %421 = vmatpush1.msra.mxu0 %v363
        %422 = vmatprep.subr.mxu0 %v367
        %423 = vmatpush1.msra.mxu0 %v366
        %424 = vmatprep.subr.mxu0 %v370
        %425 = vmatpush1.msra.mxu0 %v369
        %426 = vmatprep.subr.mxu0 %v373
        %427 = vmatpush1.msra.mxu0 %v372
        %428 = vmatprep.subr.mxu0 %v376
        %429 = vmatpush1.msra.mxu0 %v375
        %430 = vmatprep.subr.mxu0 %v379
        %431 = vmatpush1.msra.mxu0 %v378
        %432 = vmatprep.subr.mxu0 %v382
        %433 = vmatpush1.msra.mxu0 %v381
        %434 = vmatprep.subr.mxu0 %v385
        %435 = vmatpush1.msra.mxu0 %v384
        %436 = vmatprep.subr.mxu0 0.0
        %437 = vmatpush1.msra.mxu0 0.0
        %438 = vmatprep.subr.mxu0 0.0
        %439 = vmatpush1.msra.mxu0 0.0
        %440 = vmatprep.subr.mxu0 0.0
        %441 = vmatpush1.msra.mxu0 0.0
        %442 = vmatprep.subr.mxu0 0.0
        %443 = vmatpush1.msra.mxu0 0.0
        %444 = vmatprep.subr.mxu0 0.0
        %445 = vmatpush1.msra.mxu0 0.0
        %446 = vmatprep.subr.mxu0 0.0
        %447 = vmatpush1.msra.mxu0 0.0
        %448 = vmatprep.subr.mxu0 0.0
        %449 = vmatpush1.msra.mxu0 0.0
        %450 = vmatprep.subr.mxu0 0.0
        %451 = vmatpush1.msra.mxu0 0.0
        %452 = vmatprep.subr.mxu0 0.0
        %453 = vmatpush1.msra.mxu0 0.0
        %454 = vmatprep.subr.mxu0 0.0
        %455 = vmatpush1.msra.mxu0 0.0
        %456 = vmatprep.subr.mxu0 0.0
        %457 = vmatpush1.msra.mxu0 0.0
        %458 = vmatprep.subr.mxu0 0.0
        %459 = vmatpush1.msra.mxu0 0.0
        %460 = vmatprep.subr.mxu0 0.0
        %461 = vmatpush1.msra.mxu0 0.0
        %462 = vmatprep.subr.mxu0 0.0
        %463 = vmatpush1.msra.mxu0 0.0
        %464 = vmatprep.subr.mxu0 0.0
        %465 = vmatpush1.msra.mxu0 0.0
        %466 = vmatprep.subr.mxu0 0.0
        %467 = vmatpush1.msra.mxu0 0.0
        %468 = vmatprep.mubr.f32.mxu0 0.0
        %469 = vmatmul.mubr.f32.gmra.mrb[0].mxu0 %v338
        %v470 = vpop.f32.mrb[0].mxu0
        %v471 = vadd.f32 %v392, %v470
        %v472 = vpop.f32.mrb[0].mxu0
        %v473 = vadd.f32 %v396, %v472
        %474 = vdwg.mxu0
        %475 = vmatprep.subr.mxu0 0.0
        %476 = vmatpush1.msra.mxu0 %v341
        %477 = vmatprep.subr.mxu0 0.0
        %478 = vmatpush1.msra.mxu0 %v344
        %479 = vmatprep.subr.mxu0 0.0
        %480 = vmatpush1.msra.mxu0 %v347
        %481 = vmatprep.subr.mxu0 0.0
        %482 = vmatpush1.msra.mxu0 %v350
        %483 = vmatprep.subr.mxu0 0.0
        %484 = vmatpush1.msra.mxu0 %v353
        %485 = vmatprep.subr.mxu0 0.0
        %486 = vmatpush1.msra.mxu0 %v356
        %487 = vmatprep.subr.mxu0 0.0
        %488 = vmatpush1.msra.mxu0 %v359
        %489 = vmatprep.subr.mxu0 0.0
        %490 = vmatpush1.msra.mxu0 %v362
        %491 = vmatprep.subr.mxu0 0.0
        %492 = vmatpush1.msra.mxu0 %v365
        %493 = vmatprep.subr.mxu0 0.0
        %494 = vmatpush1.msra.mxu0 %v368
        %495 = vmatprep.subr.mxu0 0.0
        %496 = vmatpush1.msra.mxu0 %v371
        %497 = vmatprep.subr.mxu0 0.0
        %498 = vmatpush1.msra.mxu0 %v374
        %499 = vmatprep.subr.mxu0 0.0
        %500 = vmatpush1.msra.mxu0 %v377
        %501 = vmatprep.subr.mxu0 0.0
        %502 = vmatpush1.msra.mxu0 %v380
        %503 = vmatprep.subr.mxu0 0.0
        %504 = vmatpush1.msra.mxu0 %v383
        %505 = vmatprep.subr.mxu0 0.0
        %506 = vmatpush1.msra.mxu0 %v386
        %507 = vmatprep.subr.mxu0 0.0
        %508 = vmatpush1.msra.mxu0 0.0
        %509 = vmatprep.subr.mxu0 0.0
        %510 = vmatpush1.msra.mxu0 0.0
        %511 = vmatprep.subr.mxu0 0.0
        %512 = vmatpush1.msra.mxu0 0.0
        %513 = vmatprep.subr.mxu0 0.0
        %514 = vmatpush1.msra.mxu0 0.0
        %515 = vmatprep.subr.mxu0 0.0
        %516 = vmatpush1.msra.mxu0 0.0
        %517 = vmatprep.subr.mxu0 0.0
        %518 = vmatpush1.msra.mxu0 0.0
        %519 = vmatprep.subr.mxu0 0.0
        %520 = vmatpush1.msra.mxu0 0.0
        %521 = vmatprep.subr.mxu0 0.0
        %522 = vmatpush1.msra.mxu0 0.0
        %523 = vmatprep.subr.mxu0 0.0
        %524 = vmatpush1.msra.mxu0 0.0
        %525 = vmatprep.subr.mxu0 0.0
        %526 = vmatpush1.msra.mxu0 0.0
        %527 = vmatprep.subr.mxu0 0.0
        %528 = vmatpush1.msra.mxu0 0.0
        %529 = vmatprep.subr.mxu0 0.0
        %530 = vmatpush1.msra.mxu0 0.0
        %531 = vmatprep.subr.mxu0 0.0
        %532 = vmatpush1.msra.mxu0 0.0
        %533 = vmatprep.subr.mxu0 0.0
        %534 = vmatpush1.msra.mxu0 0.0
        %535 = vmatprep.subr.mxu0 0.0
        %536 = vmatpush1.msra.mxu0 0.0
        %537 = vmatprep.subr.mxu0 0.0
        %538 = vmatpush1.msra.mxu0 0.0
        %539 = vmatprep.mubr.f32.mxu0 0.0
        %540 = vmatmul.mubr.f32.gmra.mrb[0].mxu0 %v338
        %v541 = vpop.f32.mrb[0].mxu0
        %v542 = vadd.f32 %v400, %v541
        %v543 = vpop.f32.mrb[0].mxu0
        %544 = vdwg.mxu0
        %545 = vmatprep.subr.mxu0 0.0
        %546 = vmatpush1.xpose.msra.mxu0 %v473
        %547 = vmatprep.subr.mxu0 0.0
        %548 = vmatpush1.xpose.msra.mxu0 0.0
        %549 = vmatprep.subr.mxu0 0.0
        %550 = vmatpush1.xpose.msra.mxu0 0.0
        %551 = vmatprep.subr.mxu0 0.0
        %552 = vmatpush1.xpose.msra.mxu0 0.0
        %553 = vmatprep.subr.mxu0 0.0
        %554 = vmatpush1.xpose.msra.mxu0 0.0
        %555 = vmatprep.subr.mxu0 0.0
        %556 = vmatpush1.xpose.msra.mxu0 0.0
        %557 = vmatprep.subr.mxu0 0.0
        %558 = vmatpush1.xpose.msra.mxu0 0.0
        %559 = vmatprep.subr.mxu0 0.0
        %560 = vmatpush1.xpose.msra.mxu0 0.0
        %561 = vmatprep.subr.mxu0 0.0
        %562 = vmatpush1.xpose.msra.mxu0 0.0
        %563 = vmatprep.subr.mxu0 0.0
        %564 = vmatpush1.xpose.msra.mxu0 0.0
        %565 = vmatprep.subr.mxu0 0.0
        %566 = vmatpush1.xpose.msra.mxu0 0.0
        %567 = vmatprep.subr.mxu0 0.0
        %568 = vmatpush1.xpose.msra.mxu0 0.0
        %569 = vmatprep.subr.mxu0 0.0
        %570 = vmatpush1.xpose.msra.mxu0 0.0
        %571 = vmatprep.subr.mxu0 0.0
        %572 = vmatpush1.xpose.msra.mxu0 0.0
        %573 = vmatprep.subr.mxu0 0.0
        %574 = vmatpush1.xpose.msra.mxu0 0.0
        %575 = vmatprep.subr.mxu0 0.0
        %576 = vmatpush1.xpose.msra.mxu0 0.0
        %577 = vmatprep.subr.mxu0 0.0
        %578 = vmatpush1.xpose.msra.mxu0 0.0
        %579 = vmatprep.subr.mxu0 0.0
        %580 = vmatpush1.xpose.msra.mxu0 0.0
        %581 = vmatprep.subr.mxu0 0.0
        %582 = vmatpush1.xpose.msra.mxu0 0.0
        %583 = vmatprep.subr.mxu0 0.0
        %584 = vmatpush1.xpose.msra.mxu0 0.0
        %585 = vmatprep.subr.mxu0 0.0
        %586 = vmatpush1.xpose.msra.mxu0 0.0
        %587 = vmatprep.subr.mxu0 0.0
        %588 = vmatpush1.xpose.msra.mxu0 0.0
        %589 = vmatprep.subr.mxu0 0.0
        %590 = vmatpush1.xpose.msra.mxu0 0.0
        %591 = vmatprep.subr.mxu0 0.0
        %592 = vmatpush1.xpose.msra.mxu0 0.0
        %593 = vmatprep.subr.mxu0 0.0
        %594 = vmatpush1.xpose.msra.mxu0 0.0
        %595 = vmatprep.subr.mxu0 0.0
        %596 = vmatpush1.xpose.msra.mxu0 0.0
        %597 = vmatprep.subr.mxu0 0.0
        %598 = vmatpush1.xpose.msra.mxu0 0.0
        %599 = vmatprep.subr.mxu0 0.0
        %600 = vmatpush1.xpose.msra.mxu0 0.0
        %601 = vmatprep.subr.mxu0 0.0
        %602 = vmatpush1.xpose.msra.mxu0 0.0
        %603 = vmatprep.subr.mxu0 0.0
        %604 = vmatpush1.xpose.msra.mxu0 0.0
        %605 = vmatprep.subr.mxu0 0.0
        %606 = vmatpush1.xpose.msra.mxu0 0.0
        %607 = vmatprep.subr.mxu0 0.0
        %608 = vmatpush1.xpose.msra.mxu0 0.0
        %609 = vmatprep.mubr.f32.mxu0 0.0
        %610 = vmatmul.mubr.f32.gmra.mrb[0].mxu0 %v471
        %v611 = vpop.f32.mrb[0].mxu0
        %v612 = vadd.f32 0.0, %v611
        %v613 = vpop.f32.mrb[0].mxu0
        %614 = vdwg.mxu0
        %v615 = vlaneseq
        %v616 = vshrl.u32 %v615, 7
        %v617 = vlaneseq
        %v618 = vand.u32 %v617, 127
        %vm619 = vcmp.le.s32.totalorder %v618, %v616
        %v620 = vsel %vm619, %v612, -1e+30
        %vm621 = vcmask 64512
        %v622 = vsel %vm621, %v620, -inf
        %623 = vmax.xlane.f32.xlu0 %v622
        %v624 = vpop.xlane.xlu0 %623
        %v625 = vsub.f32 %v620, %v624
        %v626 = vmul.f32 %v625, 1.442695
        %v627 = vpow.pop %v626
        %v628 = vsel %vm621, %v627, 0.0
        %629 = vadd.xlane.f32.xlu0 %v628
        %v630 = vpop.xlane.xlu0 %629
        %v631 = vrcp.pop %v630
        %v632 = vmul.f32 %v627, %v631
        %v634 = vsel %vm621, %v632, 0
        %636 = vmatprep.subr.mxu0 0.0
        %637 = vmatpush1.msra.mxu0 %v542
        %638 = vmatprep.subr.mxu0 0.0
        %639 = vmatpush1.msra.mxu0 0.0
        %640 = vmatprep.subr.mxu0 0.0
        %641 = vmatpush1.msra.mxu0 0.0
        %642 = vmatprep.subr.mxu0 0.0
        %643 = vmatpush1.msra.mxu0 0.0
        %644 = vmatprep.subr.mxu0 0.0
        %645 = vmatpush1.msra.mxu0 0.0
        %646 = vmatprep.subr.mxu0 0.0
        %647 = vmatpush1.msra.mxu0 0.0
        %648 = vmatprep.subr.mxu0 0.0
        %649 = vmatpush1.msra.mxu0 0.0
        %650 = vmatprep.subr.mxu0 0.0
        %651 = vmatpush1.msra.mxu0 0.0
        %652 = vmatprep.subr.mxu0 0.0
        %653 = vmatpush1.msra.mxu0 0.0
        %654 = vmatprep.subr.mxu0 0.0
        %655 = vmatpush1.msra.mxu0 0.0
        %656 = vmatprep.subr.mxu0 0.0
        %657 = vmatpush1.msra.mxu0 0.0
        %658 = vmatprep.subr.mxu0 0.0
        %659 = vmatpush1.msra.mxu0 0.0
        %660 = vmatprep.subr.mxu0 0.0
        %661 = vmatpush1.msra.mxu0 0.0
        %662 = vmatprep.subr.mxu0 0.0
        %663 = vmatpush1.msra.mxu0 0.0
        %664 = vmatprep.subr.mxu0 0.0
        %665 = vmatpush1.msra.mxu0 0.0
        %666 = vmatprep.subr.mxu0 0.0
        %667 = vmatpush1.msra.mxu0 0.0
        %668 = vmatprep.subr.mxu0 0.0
        %669 = vmatpush1.msra.mxu0 0.0
        %670 = vmatprep.subr.mxu0 0.0
        %671 = vmatpush1.msra.mxu0 0.0
        %672 = vmatprep.subr.mxu0 0.0
        %673 = vmatpush1.msra.mxu0 0.0
        %674 = vmatprep.subr.mxu0 0.0
        %675 = vmatpush1.msra.mxu0 0.0
        %676 = vmatprep.subr.mxu0 0.0
        %677 = vmatpush1.msra.mxu0 0.0
        %678 = vmatprep.subr.mxu0 0.0
        %679 = vmatpush1.msra.mxu0 0.0
        %680 = vmatprep.subr.mxu0 0.0
        %681 = vmatpush1.msra.mxu0 0.0
        %682 = vmatprep.subr.mxu0 0.0
        %683 = vmatpush1.msra.mxu0 0.0
        %684 = vmatprep.subr.mxu0 0.0
        %685 = vmatpush1.msra.mxu0 0.0
        %686 = vmatprep.subr.mxu0 0.0
        %687 = vmatpush1.msra.mxu0 0.0
        %688 = vmatprep.subr.mxu0 0.0
        %689 = vmatpush1.msra.mxu0 0.0
        %690 = vmatprep.subr.mxu0 0.0
        %691 = vmatpush1.msra.mxu0 0.0
        %692 = vmatprep.subr.mxu0 0.0
        %693 = vmatpush1.msra.mxu0 0.0
        %694 = vmatprep.subr.mxu0 0.0
        %695 = vmatpush1.msra.mxu0 0.0
        %696 = vmatprep.subr.mxu0 0.0
        %697 = vmatpush1.msra.mxu0 0.0
        %698 = vmatprep.subr.mxu0 0.0
        %699 = vmatpush1.msra.mxu0 0.0
        %700 = vmatprep.mubr.f32.mxu0 0.0
        %701 = vmatmul.mubr.f32.gmra.mrb[0].mxu0 %v634
        %v702 = vpop.f32.mrb[0].mxu0
        %v703 = vadd.f32 0.0, %v702
        %v704 = vpop.f32.mrb[0].mxu0
        %705 = vdwg.mxu0
        %v706 = vadd.f32 %v338, %v703
        %v707 = vld [vmem:[#allocation7] sm:$0xff]
        %v708 = vld [vmem:[#allocation7 + $0x8] sm:$0xff]
        %v709 = vld [vmem:[#allocation7 + $0x10] sm:$0xff]
        %v710 = vld [vmem:[#allocation7 + $0x18] sm:$0xff]
        %v711 = vld [vmem:[#allocation7 + $0x20] sm:$0xff]
        %v712 = vld [vmem:[#allocation7 + $0x28] sm:$0xff]
        %v713 = vld [vmem:[#allocation7 + $0x30] sm:$0xff]
        %v714 = vld [vmem:[#allocation7 + $0x38] sm:$0xff]
        %v715 = vld [vmem:[#allocation7 + $0x40] sm:$0xff]
        %v716 = vld [vmem:[#allocation7 + $0x48] sm:$0xff]
        %v717 = vld [vmem:[#allocation7 + $0x50] sm:$0xff]
        %v718 = vld [vmem:[#allocation7 + $0x58] sm:$0xff]
        %v719 = vld [vmem:[#allocation7 + $0x60] sm:$0xff]
        %v720 = vld [vmem:[#allocation7 + $0x68] sm:$0xff]
        %v721 = vld [vmem:[#allocation7 + $0x70] sm:$0xff]
        %v722 = vld [vmem:[#allocation7 + $0x78] sm:$0xff]
        %v723 = vld [vmem:[%s4] sm:$0x1]
        %v725 = vlaneseq
        %v726 = vshrl.u32 %v725, 7
        %v727 = vsub.s32 0, %v726
        %v728 = vrot.slane %v723, %v727
        %730 = vmatprep.subr.mxu0 0.0
        %731 = vmatpush1.msra.mxu0 %v707
        %732 = vmatprep.subr.mxu0 0.0
        %733 = vmatpush1.msra.mxu0 %v708
        %734 = vmatprep.subr.mxu0 0.0
        %735 = vmatpush1.msra.mxu0 %v709
        %736 = vmatprep.subr.mxu0 0.0
        %737 = vmatpush1.msra.mxu0 %v710
        %738 = vmatprep.subr.mxu0 0.0
        %739 = vmatpush1.msra.mxu0 %v711
        %740 = vmatprep.subr.mxu0 0.0
        %741 = vmatpush1.msra.mxu0 %v712
        %742 = vmatprep.subr.mxu0 0.0
        %743 = vmatpush1.msra.mxu0 %v713
        %744 = vmatprep.subr.mxu0 0.0
        %745 = vmatpush1.msra.mxu0 %v714
        %746 = vmatprep.subr.mxu0 0.0
        %747 = vmatpush1.msra.mxu0 %v715
        %748 = vmatprep.subr.mxu0 0.0
        %749 = vmatpush1.msra.mxu0 %v716
        %750 = vmatprep.subr.mxu0 0.0
        %751 = vmatpush1.msra.mxu0 %v717
        %752 = vmatprep.subr.mxu0 0.0
        %753 = vmatpush1.msra.mxu0 %v718
        %754 = vmatprep.subr.mxu0 0.0
        %755 = vmatpush1.msra.mxu0 %v719
        %756 = vmatprep.subr.mxu0 0.0
        %757 = vmatpush1.msra.mxu0 %v720
        %758 = vmatprep.subr.mxu0 0.0
        %759 = vmatpush1.msra.mxu0 %v721
        %760 = vmatprep.subr.mxu0 0.0
        %761 = vmatpush1.msra.mxu0 %v722
        %762 = vmatprep.subr.mxu0 0.0
        %763 = vmatpush1.msra.mxu0 0.0
        %764 = vmatprep.subr.mxu0 0.0
        %765 = vmatpush1.msra.mxu0 0.0
        %766 = vmatprep.subr.mxu0 0.0
        %767 = vmatpush1.msra.mxu0 0.0
        %768 = vmatprep.subr.mxu0 0.0
        %769 = vmatpush1.msra.mxu0 0.0
        %770 = vmatprep.subr.mxu0 0.0
        %771 = vmatpush1.msra.mxu0 0.0
        %772 = vmatprep.subr.mxu0 0.0
        %773 = vmatpush1.msra.mxu0 0.0
        %774 = vmatprep.subr.mxu0 0.0
        %775 = vmatpush1.msra.mxu0 0.0
        %776 = vmatprep.subr.mxu0 0.0
        %777 = vmatpush1.msra.mxu0 0.0
        %778 = vmatprep.subr.mxu0 0.0
        %779 = vmatpush1.msra.mxu0 0.0
        %780 = vmatprep.subr.mxu0 0.0
        %781 = vmatpush1.msra.mxu0 0.0
        %782 = vmatprep.subr.mxu0 0.0
        %783 = vmatpush1.msra.mxu0 0.0
        %784 = vmatprep.subr.mxu0 0.0
        %785 = vmatpush1.msra.mxu0 0.0
        %786 = vmatprep.subr.mxu0 0.0
        %787 = vmatpush1.msra.mxu0 0.0
        %788 = vmatprep.subr.mxu0 0.0
        %789 = vmatpush1.msra.mxu0 0.0
        %790 = vmatprep.subr.mxu0 0.0
        %791 = vmatpush1.msra.mxu0 0.0
        %792 = vmatprep.subr.mxu0 0.0
        %793 = vmatpush1.msra.mxu0 0.0
        %794 = vmatprep.mubr.f32.mxu0 0.0
        %795 = vmatmul.mubr.f32.gmra.mrb[0].mxu0 %v706
        %v796 = vpop.f32.mrb[0].mxu0
        %v797 = vadd.f32 %v728, %v796
        %v798 = vpop.f32.mrb[0].mxu0
        %799 = vdwg.mxu0
        %v800 = vmax.f32 %v797, 0.0
        %v801 = vld [vmem:[#allocation8] sm:$0xff]
        %v802 = vld [vmem:[#allocation8 + $0x8] sm:$0xff]
        %v803 = vld [vmem:[#allocation8 + $0x10] sm:$0xff]
        %v804 = vld [vmem:[#allocation8 + $0x18] sm:$0xff]
        %v805 = vld [vmem:[#allocation8 + $0x20] sm:$0xff]
        %v806 = vld [vmem:[#allocation8 + $0x28] sm:$0xff]
        %v807 = vld [vmem:[#allocation8 + $0x30] sm:$0xff]
        %v808 = vld [vmem:[#allocation8 + $0x38] sm:$0xff]
        %v809 = vld [vmem:[#allocation8 + $0x40] sm:$0xff]
        %v810 = vld [vmem:[#allocation8 + $0x48] sm:$0xff]
        %v811 = vld [vmem:[#allocation8 + $0x50] sm:$0xff]
        %v812 = vld [vmem:[#allocation8 + $0x58] sm:$0xff]
        %v813 = vld [vmem:[#allocation8 + $0x60] sm:$0xff]
        %v814 = vld [vmem:[#allocation8 + $0x68] sm:$0xff]
        %v815 = vld [vmem:[#allocation8 + $0x70] sm:$0xff]
        %v816 = vld [vmem:[#allocation8 + $0x78] sm:$0xff]
        %v817 = vld [vmem:[%s6] sm:$0x1]
        %v819 = vlaneseq
        %v820 = vshrl.u32 %v819, 7
        %v821 = vsub.s32 0, %v820
        %v822 = vrot.slane %v817, %v821
        %824 = vmatprep.subr.mxu0 0.0
        %825 = vmatpush1.msra.mxu0 %v801
        %826 = vmatprep.subr.mxu0 0.0
        %827 = vmatpush1.msra.mxu0 %v802
        %828 = vmatprep.subr.mxu0 0.0
        %829 = vmatpush1.msra.mxu0 %v803
        %830 = vmatprep.subr.mxu0 0.0
        %831 = vmatpush1.msra.mxu0 %v804
        %832 = vmatprep.subr.mxu0 0.0
        %833 = vmatpush1.msra.mxu0 %v805
        %834 = vmatprep.subr.mxu0 0.0
        %835 = vmatpush1.msra.mxu0 %v806
        %836 = vmatprep.subr.mxu0 0.0
        %837 = vmatpush1.msra.mxu0 %v807
        %838 = vmatprep.subr.mxu0 0.0
        %839 = vmatpush1.msra.mxu0 %v808
        %840 = vmatprep.subr.mxu0 0.0
        %841 = vmatpush1.msra.mxu0 %v809
        %842 = vmatprep.subr.mxu0 0.0
        %843 = vmatpush1.msra.mxu0 %v810
        %844 = vmatprep.subr.mxu0 0.0
        %845 = vmatpush1.msra.mxu0 %v811
        %846 = vmatprep.subr.mxu0 0.0
        %847 = vmatpush1.msra.mxu0 %v812
        %848 = vmatprep.subr.mxu0 0.0
        %849 = vmatpush1.msra.mxu0 %v813
        %850 = vmatprep.subr.mxu0 0.0
        %851 = vmatpush1.msra.mxu0 %v814
        %852 = vmatprep.subr.mxu0 0.0
        %853 = vmatpush1.msra.mxu0 %v815
        %854 = vmatprep.subr.mxu0 0.0
        %855 = vmatpush1.msra.mxu0 %v816
        %856 = vmatprep.subr.mxu0 0.0
        %857 = vmatpush1.msra.mxu0 0.0
        %858 = vmatprep.subr.mxu0 0.0
        %859 = vmatpush1.msra.mxu0 0.0
        %860 = vmatprep.subr.mxu0 0.0
        %861 = vmatpush1.msra.mxu0 0.0
        %862 = vmatprep.subr.mxu0 0.0
        %863 = vmatpush1.msra.mxu0 0.0
        %864 = vmatprep.subr.mxu0 0.0
        %865 = vmatpush1.msra.mxu0 0.0
        %866 = vmatprep.subr.mxu0 0.0
        %867 = vmatpush1.msra.mxu0 0.0
        %868 = vmatprep.subr.mxu0 0.0
        %869 = vmatpush1.msra.mxu0 0.0
        %870 = vmatprep.subr.mxu0 0.0
        %871 = vmatpush1.msra.mxu0 0.0
        %872 = vmatprep.subr.mxu0 0.0
        %873 = vmatpush1.msra.mxu0 0.0
        %874 = vmatprep.subr.mxu0 0.0
        %875 = vmatpush1.msra.mxu0 0.0
        %876 = vmatprep.subr.mxu0 0.0
        %877 = vmatpush1.msra.mxu0 0.0
        %878 = vmatprep.subr.mxu0 0.0
        %879 = vmatpush1.msra.mxu0 0.0
        %880 = vmatprep.subr.mxu0 0.0
        %881 = vmatpush1.msra.mxu0 0.0
        %882 = vmatprep.subr.mxu0 0.0
        %883 = vmatpush1.msra.mxu0 0.0
        %884 = vmatprep.subr.mxu0 0.0
        %885 = vmatpush1.msra.mxu0 0.0
        %886 = vmatprep.subr.mxu0 0.0
        %887 = vmatpush1.msra.mxu0 0.0
        %888 = vmatprep.mubr.f32.mxu0 0.0
        %889 = vmatmul.mubr.f32.gmra.mrb[0].mxu0 %v800
        %v890 = vpop.f32.mrb[0].mxu0
        %v891 = vadd.f32 %v822, %v890
        %v892 = vpop.f32.mrb[0].mxu0
        %893 = vdwg.mxu0
        %v894 = vadd.f32 %v706, %v891
        %895 = vst [vmem:[%s337] sm:$0xff] %v894
        %s896 = sand.u32 %s186, 1
        %s897 = scalar_lea.sflag [#allocation4], %s896
        %s898 = sand.u32 %s186, 1
        %s899 = smul.addr %s898, 8
        %s900 = scalar_lea.vmem [#allocation10], %s899
        // Predicated region
        $region65: #{tpu_custom_call.1} parent=47 // pred_check
          %p901 = pneg %p196
        $region66: #{tpu_custom_call.1} parent=47 // pred_check_branch
          %903 = sbr.rel (%p901) target = $region68
        $region67: #{tpu_custom_call.1} parent=47 // pred_region
          %s905 = ssub.s32 128, 128
          %906 = vsyncadd %s897, %s905
          %s907 = smul.addr %s26, 128
          %s908 = scalar_lea.hbm %s7, %s907
          %s910 = sshll.u32 %s900, 4
          %s911 = int_to_ptr.vmem [resolvable:$true] %s910
          %913 = dma.vmem_to_hbm [thread:$0]  %s911, 128, %s908, %s897
        $region68: #{tpu_custom_call.1} parent=47 // pred_fallthru
          _
      $region48: #{tpu_custom_call.1} parent=5 // pred_fallthru
        _
      %p914 = scmp.le.s32.totalorder 2, %s21
      // Predicated region
      $region69: #{tpu_custom_call.1} parent=5 // pred_check
        %p915 = pneg %p914
      $region70: #{tpu_custom_call.1} parent=5 // pred_check_branch
        %917 = sbr.rel (%p915) target = $region72
      $region71: #{tpu_custom_call.1} parent=5 // pred_region
        %s918 = ssub.s32 %s21, 2
        // Predicated region
        $region73: #{tpu_custom_call.1} parent=71 // pred_check
          %p919 = pneg %p202
        $region74: #{tpu_custom_call.1} parent=71 // pred_check_branch
          %921 = sbr.rel (%p919) target = $region76
        $region75: #{tpu_custom_call.1} parent=71 // pred_region
          %s922 = sand.u32 %s187, 1
          %s923 = scalar_lea.sflag [#allocation4], %s922
          %s924 = sand.u32 %s187, 1
          %s925 = smul.addr %s924, 8
          %s926 = scalar_lea.vmem [#allocation10], %s925
          %927 = dma.done %s923, 128
        $region76: #{tpu_custom_call.1} parent=71 // pred_fallthru
          _
      $region72: #{tpu_custom_call.1} parent=5 // pred_fallthru
        _
    $region6: #{tpu_custom_call.1} parent=1 // loop_footer
      %s25 = sadd.s32 1, %s21
    $region7: #{tpu_custom_call.1} parent=1 // loop_footer_branch
      %20 = sbr.rel target = $region3
    $region8: #{tpu_custom_call.1} parent=1 // loop_exit
      _
    %928 = vsyncpa [#allocation3], 1
    %s929 = scalar_lea.sflag [#allocation3], 1
    %930 = vsyncpa %s929, 1
    %931 = vsyncpa [#allocation6], 1
    %932 = vsyncpa [#allocation9], 1
    %933 = vsyncpa [#allocation4], 1
    %s934 = scalar_lea.sflag [#allocation4], 1
    %935 = vsyncpa %s934, 1

</llo_original>
